<compile_context>
chip_gen: v7x
topology: tpu7x:2x2x1
jax: 0.10.0
libtpu: 0.0.40
codegen_flags: <defaults>
</compile_context>

<pallas_src>
import functools

import jax
import jax.numpy as jnp
from jax.experimental import pallas as pl
from jax.experimental.pallas import tpu as pltpu

MARGIN = 0.2
NUM_NEGATIVES = 2          # k (kernel implements k == 2, like the module default)


def _round_up(x, m):
    return (x + m - 1) // m * m


def _sublane_granule(*dtypes):
    """Native sublane tiling per dtype: f32 -> 8, bf16 -> 16, int8/bool -> 32."""
    return max(32 // max(1, jnp.dtype(d).itemsize) for d in dtypes)


def _vmem_budget():
    """(per-input f32 tile bytes, vmem_limit_bytes), generation aware."""
    try:
        cap = pltpu.get_tpu_info().vmem_capacity_bytes
    except Exception:          # unknown chip / interpret mode
        cap = None
    if cap is not None and cap >= 100 * 1024 * 1024:
        # v5e / v6e: 128 MiB VMEM.  Mem-bound kernels only approach the HBM
        # roofline with wide tiles, so go big.
        return 8 * 1024 * 1024, 100 * 1024 * 1024
    # v7x (64 MiB per TensorCore) or unknown: stay conservative so
    # 3 inputs x 2 pipeline buffers plus ~4-5 live f32 temporaries still fit.
    return 3 * 1024 * 1024, 48 * 1024 * 1024


def _choose_batch_tile(B, N, granule, per_input_bytes):
    """Rows per grid step: as big as the VMEM budget allows, >= 2 steps if possible."""
    rows = max(granule, (per_input_bytes // (4 * N)) // granule * granule)
    if B > 2 * granule:
        # Guarantee at least 2 "parallel" grid steps so both v7x TensorCores
        # get work; on single-TC v5e/v6e one extra step costs ~0.35 us only.
        rows = min(rows, _round_up(pl.cdiv(B, 2), granule))
    if rows >= B:
        rows = B               # a single full-extent block is always legal
    return rows


def _confidence_top2_kernel(enc_ref, comb_ref, gt_ref, loss_ref, *, margin):
    """Hinge loss of the two largest violation confidences per row.

    Blocks are (tile_b, N) in the natural (batch, candidate) layout; the
    candidate axis is the full-extent lane axis.  The output block is
    (tile_b, 2) = [max(0, top1 + margin), max(0, top2 + margin)].
    """
    enc = enc_ref[...].astype(jnp.float32)
    comb = comb_ref[...].astype(jnp.float32)
    gt = gt_ref[...].astype(jnp.float32)      # bool / int8 / float {0,1} -> f32
    d = enc - comb
    # gt is binary, so (2*gt - 1) * d == where(gt != 0, d, -d); this drops the
    # iota / argmax temporaries of v1 (helps the v7x VMEM budget).
    viol = jnp.where(gt != 0.0, d, -d)

    # torch.topk(k=2) values with correct tie handling: if the maximum occurs
    # more than once, the second value equals the first.
    max1 = jnp.max(viol, axis=1, keepdims=True)
    is_max = viol == max1
    num_max = jnp.sum(jnp.where(is_max, 1.0, 0.0), axis=1, keepdims=True)
    max_rest = jnp.max(jnp.where(is_max, -jnp.inf, viol), axis=1, keepdims=True)
    max2 = jnp.where(num_max > 1.5, max1, max_rest)

    # The (tile_b, 2) output is lane-width-2 (masked stores), but output
    # traffic is only 8 B/row vs >= 12*N B/row of input, so an in-kernel
    # sublane->lane relayout to a (2, tile_b) slab is not worth the risk/cost.
    loss_ref[:, 0:1] = jnp.maximum(0.0, max1 + margin)
    loss_ref[:, 1:2] = jnp.maximum(0.0, max2 + margin)


def multimodal_confidence_loss(enc_scores, comb_scores, gt, *,
                               margin=MARGIN, reduction="mean"):
    """Pallas forward of MultimodalConfidenceLoss.

    Args:
      enc_scores, comb_scores: (B, N) scores; float32 or (recommended)
        bfloat16 -- the op is HBM-bound, bf16 halves the score traffic.
      gt: (B, N) binary labels; bool / int8 recommended (1/4 the bytes of f32).
        Interpreted as "nonzero == positive".
      margin, reduction: as in the PyTorch module ('mean'|'sum'|'custom'|'none').

    Returns:
      (reduced_loss, per_row_positive_count[int32]) like the PyTorch module.
    """
    B, N = enc_scores.shape
    assert comb_scores.shape == (B, N) and gt.shape == (B, N)
    # torch.topk(k=2) raises for N < 2; for N == 1 this kernel would silently
    # return loss2 == 0, so mirror torch and reject it.
    assert N >= NUM_NEGATIVES, "need at least k=2 candidates per row"

    if gt.dtype == jnp.bool_:
        gt = gt.astype(jnp.int8)   # keep the label stream narrow & simple to lower

    per_input_bytes, vmem_limit = _vmem_budget()
    granule = _sublane_granule(enc_scores.dtype, comb_scores.dtype, gt.dtype)
    tile_b = _choose_batch_tile(B, N, granule, per_input_bytes)
    grid = (pl.cdiv(B, tile_b),)   # ragged last block instead of jnp.pad

    # TODO(synk): for very large N (per-row block above the per-input VMEM
    # budget, roughly N > 50K) tile the candidate axis with a second
    # "arbitrary" grid dim and an online top-2 merge instead of shrinking tile_b.
    # TODO(synk): for tiny N the compute lane occupancy is N/128; a batch-minor
    # producer layout (scores emitted as (N, B)) would make compute lane-dense
    # without re-introducing a wrapper-side transpose pass.
    loss_bk = pl.pallas_call(
        functools.partial(_confidence_top2_kernel, margin=float(margin)),
        grid=grid,
        in_specs=[pl.BlockSpec((tile_b, N), lambda i: (i, 0)) for _ in range(3)],
        out_specs=pl.BlockSpec((tile_b, NUM_NEGATIVES), lambda i: (i, 0)),
        out_shape=jax.ShapeDtypeStruct((B, NUM_NEGATIVES), jnp.float32),
        compiler_params=pltpu.CompilerParams(
            dimension_semantics=("parallel",),
            vmem_limit_bytes=int(vmem_limit),
        ),
    )(enc_scores, comb_scores, gt)

    # Positive counts / reduction glue on the tiny (B, 2) matrix in plain JAX.
    counts = jnp.sum(loss_bk > 0.0, axis=1).astype(jnp.int32)

    if reduction == "none":
        reduced = loss_bk
    elif reduction == "mean":
        reduced = jnp.mean(loss_bk)
    elif reduction == "custom":
        reduced = jnp.mean(jnp.sum(loss_bk, axis=1))
    else:  # 'sum'
        reduced = jnp.sum(loss_bk)
    return reduced, counts


def _reference(enc, comb, gt, margin=MARGIN, k=NUM_NEGATIVES, reduction="mean"):
    gt = gt.astype(jnp.float32)
    viol = (2.0 * gt - 1.0) * (enc.astype(jnp.float32) - comb.astype(jnp.float32))
    top = -jnp.sort(-viol, axis=1)[:, :k]
    loss = jnp.maximum(0.0, top + margin)
    if reduction == "mean":
        red = jnp.mean(loss)
    elif reduction == "custom":
        red = jnp.mean(jnp.sum(loss, axis=1))
    elif reduction == "none":
        red = loss
    else:
        red = jnp.sum(loss)
    return red, jnp.sum(loss > 0, axis=1).astype(jnp.int32)


def _check(key, B, N, score_dtype, reduction="mean"):
    k_enc, k_comb, k_gt = jax.random.split(key, 3)
    enc = jax.random.normal(k_enc, (B, N), dtype=jnp.float32).astype(score_dtype)
    comb = jax.random.normal(k_comb, (B, N), dtype=jnp.float32).astype(score_dtype)
    gt = jax.random.bernoulli(k_gt, 0.5, (B, N)).astype(jnp.int8)

    loss, counts = multimodal_confidence_loss(enc, comb, gt, reduction=reduction)
    loss = jax.block_until_ready(loss)
    counts = jax.block_until_ready(counts)

    ref_loss, ref_counts = _reference(enc, comb, gt, reduction=reduction)
    assert jnp.allclose(loss, ref_loss, atol=1e-5, rtol=1e-5), (B, N, loss, ref_loss)
    assert jnp.array_equal(counts, ref_counts), (B, N, counts, ref_counts)


if __name__ == "__main__":
    key = jax.random.PRNGKey(0)
    k1, k2, k3 = jax.random.split(key, 3)
    # 1) Single full-extent block (small batch), f32 scores + int8 labels.
    _check(k1, B=8, N=40, score_dtype=jnp.float32)
    # 2) Two "parallel" grid steps with a ragged last block (no jnp.pad path).
    _check(k2, B=72, N=16, score_dtype=jnp.float32)
    # 3) Narrow-dtype path (bf16 scores + int8 gt) and the 'custom' reduction.
    _check(k3, B=72, N=24, score_dtype=jnp.bfloat16, reduction="custom")
    print("KERNEL_OK")
</pallas_src>

<mosaic_0001>
module attributes {stable_mosaic.version = 11 : i64} {
  func.func @_confidence_top2_kernel(%arg0: i32, %arg1: memref<8x40xf32, #tpu.memory_space<vmem>>, %arg2: memref<8x40xf32, #tpu.memory_space<vmem>>, %arg3: memref<8x40xi8, #tpu.memory_space<vmem>>, %arg4: memref<8x2xf32, #tpu.memory_space<vmem>>) attributes {dimension_semantics = [#tpu.dimension_semantics<parallel>], iteration_bounds = array<i64: 1>, scalar_prefetch = 0 : i64, scratch_operands = 0 : i64, tpu.core_type = #tpu.core_type<tc>, window_params = [{transform_indices = @transform_0, window_bounds = array<i64: 8, 40>}, {transform_indices = @transform_1, window_bounds = array<i64: 8, 40>}, {transform_indices = @transform_2, window_bounds = array<i64: 8, 40>}, {transform_indices = @transform_3, window_bounds = array<i64: 8, 2>}]} {
    %c0 = arith.constant 0 : index
    %c0_0 = arith.constant 0 : index
    %0 = vector.load %arg1[%c0, %c0_0] : memref<8x40xf32, #tpu.memory_space<vmem>>, vector<8x40xf32>
    %c0_1 = arith.constant 0 : index
    %c0_2 = arith.constant 0 : index
    %1 = vector.load %arg2[%c0_1, %c0_2] : memref<8x40xf32, #tpu.memory_space<vmem>>, vector<8x40xf32>
    %c0_3 = arith.constant 0 : index
    %c0_4 = arith.constant 0 : index
    %2 = vector.load %arg3[%c0_3, %c0_4] : memref<8x40xi8, #tpu.memory_space<vmem>>, vector<8x40xi8>
    %3 = arith.sitofp %2 : vector<8x40xi8> to vector<8x40xf32>
    %4 = arith.subf %0, %1 : vector<8x40xf32>
    %cst = arith.constant 0.000000e+00 : f32
    %5 = vector.broadcast %cst : f32 to vector<8x40xf32>
    %6 = arith.cmpf one, %3, %5 : vector<8x40xf32>
    %cst_5 = arith.constant 0.000000e+00 : f32
    %7 = vector.broadcast %cst_5 : f32 to vector<8x40xf32>
    %8 = arith.subf %7, %4 : vector<8x40xf32>
    %9 = arith.select %6, %4, %8 : vector<8x40xi1>, vector<8x40xf32>
    %cst_6 = arith.constant dense<0xFF800000> : vector<8xf32>
    %10 = vector.multi_reduction <maximumf>, %9, %cst_6 [1] : vector<8x40xf32> to vector<8xf32>
    %11 = vector.shape_cast %10 : vector<8xf32> to vector<8x1xf32>
    %12 = vector.broadcast %11 : vector<8x1xf32> to vector<8x40xf32>
    %13 = arith.cmpf oeq, %9, %12 : vector<8x40xf32>
    %cst_7 = arith.constant 1.000000e+00 : f32
    %cst_8 = arith.constant 0.000000e+00 : f32
    %14 = vector.broadcast %cst_7 : f32 to vector<8x40xf32>
    %15 = vector.broadcast %cst_8 : f32 to vector<8x40xf32>
    %16 = arith.select %13, %14, %15 : vector<8x40xi1>, vector<8x40xf32>
    %cst_9 = arith.constant dense<0.000000e+00> : vector<8xf32>
    %17 = vector.multi_reduction <add>, %16, %cst_9 [1] : vector<8x40xf32> to vector<8xf32>
    %18 = vector.shape_cast %17 : vector<8xf32> to vector<8x1xf32>
    %cst_10 = arith.constant 0xFF800000 : f32
    %19 = vector.broadcast %cst_10 : f32 to vector<8x40xf32>
    %20 = arith.select %13, %19, %9 : vector<8x40xi1>, vector<8x40xf32>
    %cst_11 = arith.constant dense<0xFF800000> : vector<8xf32>
    %21 = vector.multi_reduction <maximumf>, %20, %cst_11 [1] : vector<8x40xf32> to vector<8xf32>
    %22 = vector.shape_cast %21 : vector<8xf32> to vector<8x1xf32>
    %cst_12 = arith.constant 1.500000e+00 : f32
    %23 = vector.broadcast %cst_12 : f32 to vector<8x1xf32>
    %24 = arith.cmpf ogt, %18, %23 : vector<8x1xf32>
    %25 = arith.select %24, %11, %22 : vector<8x1xi1>, vector<8x1xf32>
    %cst_13 = arith.constant 2.000000e-01 : f32
    %26 = vector.broadcast %cst_13 : f32 to vector<8x1xf32>
    %27 = arith.addf %11, %26 : vector<8x1xf32>
    %cst_14 = arith.constant 0.000000e+00 : f32
    %28 = vector.broadcast %cst_14 : f32 to vector<8x1xf32>
    %29 = arith.maximumf %28, %27 : vector<8x1xf32>
    %c0_15 = arith.constant 0 : index
    %c0_16 = arith.constant 0 : index
    %30 = vector.load %arg4[%c0_15, %c0_16] : memref<8x2xf32, #tpu.memory_space<vmem>>, vector<8x1xf32>
    tpu.vector_store %arg4[%c0_15, %c0_16], %29 {strides = array<i32>} : memref<8x2xf32, #tpu.memory_space<vmem>>, vector<8x1xf32>,
    %cst_17 = arith.constant 2.000000e-01 : f32
    %31 = vector.broadcast %cst_17 : f32 to vector<8x1xf32>
    %32 = arith.addf %25, %31 : vector<8x1xf32>
    %cst_18 = arith.constant 0.000000e+00 : f32
    %33 = vector.broadcast %cst_18 : f32 to vector<8x1xf32>
    %34 = arith.maximumf %33, %32 : vector<8x1xf32>
    %c0_19 = arith.constant 0 : index
    %c1 = arith.constant 1 : index
    %35 = vector.load %arg4[%c0_19, %c1] : memref<8x2xf32, #tpu.memory_space<vmem>>, vector<8x1xf32>
    tpu.vector_store %arg4[%c0_19, %c1], %34 {strides = array<i32>} : memref<8x2xf32, #tpu.memory_space<vmem>>, vector<8x1xf32>,
    return
  }
  func.func @transform_0(%arg0: i32) -> (i32, i32) {
    %c0_i32 = arith.constant 0 : i32
    %c0_i32_0 = arith.constant 0 : i32
    return %arg0, %c0_i32 : i32, i32
  }
  func.func @transform_1(%arg0: i32) -> (i32, i32) {
    %c0_i32 = arith.constant 0 : i32
    %c0_i32_0 = arith.constant 0 : i32
    return %arg0, %c0_i32 : i32, i32
  }
  func.func @transform_2(%arg0: i32) -> (i32, i32) {
    %c0_i32 = arith.constant 0 : i32
    %c0_i32_0 = arith.constant 0 : i32
    return %arg0, %c0_i32 : i32, i32
  }
  func.func @transform_3(%arg0: i32) -> (i32, i32) {
    %c0_i32 = arith.constant 0 : i32
    %c0_i32_0 = arith.constant 0 : i32
    return %arg0, %c0_i32 : i32, i32
  }
}

</mosaic_0001>

<llo_original>
// kernel: tpu_custom_call.1
$region0: #{tpu_custom_call.1}
  #allocation0 [shape = 'u32[]', space=smem, size = 0x4, offset = 0x4, fixed_abs, tag = 'smem constant byte address 0x4 - core index']
  #allocation1 [shape = 'u32[144,128]{1,0:T(1,128)}', space=vmem, size = 0x12000, scoped, tag = 'internal scratch']
  %s0 = inlined_call_operand.hbm [shape: f32[8,40], index: 0, kind: input, shape index: {}]
  %s1 = inlined_call_operand.hbm [shape: f32[8,40], index: 1, kind: input, shape index: {}]
  %s2 = inlined_call_operand.vmem [shape: s8[8,40], index: 2, kind: input, shape index: {}]
  %s3 = inlined_call_operand.vmem [shape: f32[8,2], index: 3, kind: output, shape index: {}]
  %s4 = sld [smem:[#allocation0]]
  $region30: #{tpu_custom_call.1} parent=0
    _
  %s6 = ssub.s32 1, %s4
  %s7 = scalar_select 0, %s6, %s4
  $region1: #{tpu_custom_call.1} parent=0
    #allocation2 [shape = 'u8[4096]{0}', space=vmem, size = 0x1000, scoped, tag = 'input window, operand 0, single buffered']
    #allocation3 [shape = 's32[1]{0}', space=sflag, size = 0x4, scoped, tag = 'scoped memory for tpu_custom_call.1']
    #allocation4 [shape = 'u8[4096]{0}', space=vmem, size = 0x1000, scoped, tag = 'input window, operand 1, single buffered']
    #allocation5 [shape = 's32[1]{0}', space=sflag, size = 0x4, scoped, tag = 'scoped memory for tpu_custom_call.1']
    %8 = vsyncpa [#allocation3], 0
    %9 = vsyncpa [#allocation5], 0
    // Predicated region
    $region2: #{tpu_custom_call.1} parent=1 // pred_check
      _
    $region3: #{tpu_custom_call.1} parent=1 // pred_check_branch
      %11 = sbr.rel (0) target = $region5
    $region4: #{tpu_custom_call.1} parent=1 // pred_region
      %s13 = ssub.s32 128, 128
      %14 = vsyncadd [#allocation3], %s13
      %s16 = sshll.u32 [#allocation2], 4
      %s17 = int_to_ptr.vmem [resolvable:$true] %s16
      %19 = dma.hbm_to_vmem [thread:$0]  %s0, 128, %s17, [#allocation3]
    $region5: #{tpu_custom_call.1} parent=1 // pred_fallthru
      _
    // Predicated region
    $region6: #{tpu_custom_call.1} parent=1 // pred_check
      _
    $region7: #{tpu_custom_call.1} parent=1 // pred_check_branch
      %21 = sbr.rel (0) target = $region9
    $region8: #{tpu_custom_call.1} parent=1 // pred_region
      %s23 = ssub.s32 128, 128
      %24 = vsyncadd [#allocation5], %s23
      %s26 = sshll.u32 [#allocation4], 4
      %s27 = int_to_ptr.vmem [resolvable:$true] %s26
      %29 = dma.hbm_to_vmem [thread:$0]  %s1, 128, %s27, [#allocation5]
    $region9: #{tpu_custom_call.1} parent=1 // pred_fallthru
      _
    // Predicated region
    $region10: #{tpu_custom_call.1} parent=1 // pred_check
      _
    $region11: #{tpu_custom_call.1} parent=1 // pred_check_branch
      %31 = sbr.rel (0) target = $region13
    $region12: #{tpu_custom_call.1} parent=1 // pred_region
      _
    $region13: #{tpu_custom_call.1} parent=1 // pred_fallthru
      _
    // Predicated region
    $region14: #{tpu_custom_call.1} parent=1 // pred_check
      _
    $region15: #{tpu_custom_call.1} parent=1 // pred_check_branch
      %33 = sbr.rel (0) target = $region17
    $region16: #{tpu_custom_call.1} parent=1 // pred_region
      %34 = dma.done [#allocation3], 128
    $region17: #{tpu_custom_call.1} parent=1 // pred_fallthru
      _
    // Predicated region
    $region18: #{tpu_custom_call.1} parent=1 // pred_check
      _
    $region19: #{tpu_custom_call.1} parent=1 // pred_check_branch
      %36 = sbr.rel (0) target = $region21
    $region20: #{tpu_custom_call.1} parent=1 // pred_region
      %37 = dma.done [#allocation5], 128
    $region21: #{tpu_custom_call.1} parent=1 // pred_fallthru
      _
    %v38 = vld [vmem:[#allocation2] sm:$0xff]
    %v39 = vld [vmem:[#allocation4] sm:$0xff]
    %v40 = vld [vmem:[%s2] sm:$0x3]
    %v41 = vunpack.c.0.s8 %v40
    %v42 = vcvt.s32.f32 %v41
    %v43 = vsub.f32 %v38, %v39
    %vm44 = vcmp.ne.f32.partialorder %v42, 0.0
    %v45 = vsub.f32 0.0, %v43
    %v46 = vsel %vm44, %v43, %v45
    %vm47 = vcmask 326656
    %v48 = vsel %vm47, %v46, -inf
    %49 = vmax.xlane.f32.xlu0 %v48
    %v50 = vpop.xlane.xlu0 %49
    %vm51 = vcmp.eq.f32.partialorder %v46, %v50
    %v52 = vsel %vm51, 1.0, 0.0
    %v53 = vsel %vm47, %v52, 0.0
    %54 = vadd.xlane.f32.xlu0 %v53
    %v55 = vpop.xlane.xlu0 %54
    %v56 = vsel %vm51, -inf, %v46
    %v57 = vsel %vm47, %v56, -inf
    %58 = vmax.xlane.f32.xlu0 %v57
    %v59 = vpop.xlane.xlu0 %58
    %vm60 = vcmp.gt.f32.partialorder %v55, 1.5
    %v61 = vsel %vm60, %v50, %v59
    %v62 = vadd.f32 %v50, 0.2
    %v63 = vmax.f32 %v62, 0.0
    %vm64 = vcmask 7168
    %65 = vst.msk [vmem:[%s3] sm:$0xff] %vm64, %v63
    %v66 = vadd.f32 %v61, 0.2
    %v67 = vmax.f32 %v66, 0.0
    %vm68 = vcmask 15368
    %69 = vst.msk [vmem:[%s3] sm:$0xff] %vm68, %v67
    // Predicated region
    $region22: #{tpu_custom_call.1} parent=1 // pred_check
      _
    $region23: #{tpu_custom_call.1} parent=1 // pred_check_branch
      %71 = sbr.rel (0) target = $region25
    $region24: #{tpu_custom_call.1} parent=1 // pred_region
      _
    $region25: #{tpu_custom_call.1} parent=1 // pred_fallthru
      _
    // Predicated region
    $region26: #{tpu_custom_call.1} parent=1 // pred_check
      _
    $region27: #{tpu_custom_call.1} parent=1 // pred_check_branch
      %73 = sbr.rel (0) target = $region29
    $region28: #{tpu_custom_call.1} parent=1 // pred_region
      _
    $region29: #{tpu_custom_call.1} parent=1 // pred_fallthru
      _
    %74 = vsyncpa [#allocation3], 1
    %75 = vsyncpa [#allocation5], 1

</llo_original>
